<compile_context>
chip_gen: v6e
topology: v6e:2x2x1
jax: 0.10.0
libtpu: 0.0.40
codegen_flags: <defaults>
</compile_context>

<pallas_src>
import jax
import jax.numpy as jnp
from jax import lax
from jax.experimental import pallas as pl
from jax.experimental.pallas import tpu as pltpu

BN_EPS = 1e-5
LEAKY_SLOPE = 0.1


def fcbnrl_kernel(x_ref, w_ref, gamma_ref, beta_ref, o_ref, acc_ref):
    k = pl.program_id(1)

    @pl.when(k == 0)
    def _():
        acc_ref[...] = jnp.zeros_like(acc_ref)

    # x: (N, TILE_K), w: (TILE_F, TILE_K)  ->  contract K on both (x @ w.T) on the MXU
    acc_ref[...] += lax.dot_general(
        x_ref[...], w_ref[...],
        dimension_numbers=(((1,), (1,)), ((), ())),
        preferred_element_type=jnp.float32,
    )

    @pl.when(k == pl.num_programs(1) - 1)
    def _():
        y = acc_ref[...]                      # (N, TILE_F), f32
        inv_n = 1.0 / y.shape[0]
        # one-pass batch statistics (biased variance, matches BN training mode)
        s1 = jnp.sum(y, axis=0, keepdims=True)
        s2 = jnp.sum(y * y, axis=0, keepdims=True)
        mean = s1 * inv_n
        var = jnp.maximum(s2 * inv_n - mean * mean, 0.0)
        # fused scale/shift: z = y * scale + shift
        scale = gamma_ref[...] * lax.rsqrt(var + BN_EPS)
        shift = beta_ref[...] - mean * scale
        z = y * scale + shift
        # LeakyReLU(0.1)
        o_ref[...] = jnp.where(z >= 0.0, z, LEAKY_SLOPE * z).astype(o_ref.dtype)


def nn_fcbnrl_mm(x, weight, bias, gamma, beta):
    """Fused forward of NN_FCBNRL_MM.

    Args:
      x:      (N, in_dim) f32
      weight: (out_dim, in_dim) f32  (PyTorch nn.Linear layout, no transpose needed)
      bias:   (out_dim,)  f32  (accepted for drop-in compatibility; exactly
              cancelled by BatchNorm mean-centering, so not used by the kernel)
      gamma:  (out_dim,)  f32  (BatchNorm weight)
      beta:   (out_dim,)  f32  (BatchNorm bias)
    Returns:
      (N, out_dim) f32
    """
    del bias  # shift-invariant under BatchNorm -> mathematically a no-op

    n, in_dim = x.shape
    out_dim, in_dim_w = weight.shape
    assert in_dim == in_dim_w

    # Tile sizes: lane-dense multiples of 128; prefer 256+ where shapes allow
    # (v6e/v7x MXU is 256-wide). NOTE: batch N is NOT tiled so BN stats stay exact.
    tile_f = 256 if out_dim >= 256 else 128
    tile_k = 512 if in_dim >= 512 else (256 if in_dim >= 256 else 128)

    out_pad = pl.cdiv(out_dim, tile_f) * tile_f
    in_pad = pl.cdiv(in_dim, tile_k) * tile_k

    x_p = x if in_pad == in_dim else jnp.pad(x, ((0, 0), (0, in_pad - in_dim)))
    w_p = weight
    if in_pad != in_dim or out_pad != out_dim:
        w_p = jnp.pad(weight, ((0, out_pad - out_dim), (0, in_pad - in_dim)))
    g_p = jnp.pad(gamma, (0, out_pad - out_dim)).reshape(1, out_pad)
    b_p = jnp.pad(beta, (0, out_pad - out_dim)).reshape(1, out_pad)

    nf = out_pad // tile_f
    nk = in_pad // tile_k

    # Rough VMEM budget: double-buffered x/w/gamma/beta tiles + output + f32 accumulator.
    # Clamped to 64 MiB so the same config never exceeds v7x physical VMEM.
    vmem_bytes = 4 * (2 * (n * tile_k + tile_f * tile_k + 2 * tile_f) + 3 * n * tile_f)
    vmem_bytes = min(max(vmem_bytes + (2 << 20), 8 << 20), 64 << 20)

    out_padded = pl.pallas_call(
        fcbnrl_kernel,
        out_shape=jax.ShapeDtypeStruct((n, out_pad), jnp.float32),
        grid_spec=pltpu.PrefetchScalarGridSpec(
            num_scalar_prefetch=0,
            grid=(nf, nk),                      # reduction axis (K) last
            in_specs=[
                pl.BlockSpec((n, tile_k), lambda f, k: (0, k)),       # x
                pl.BlockSpec((tile_f, tile_k), lambda f, k: (f, k)),  # weight (O,K)
                pl.BlockSpec((1, tile_f), lambda f, k: (0, f)),       # gamma
                pl.BlockSpec((1, tile_f), lambda f, k: (0, f)),       # beta
            ],
            out_specs=pl.BlockSpec((n, tile_f), lambda f, k: (0, f)),
            scratch_shapes=[pltpu.VMEM((n, tile_f), jnp.float32)],
        ),
        compiler_params=pltpu.CompilerParams(
            dimension_semantics=("parallel", "arbitrary"),
            vmem_limit_bytes=vmem_bytes,
        ),
    )(x_p, w_p, g_p, b_p)

    return out_padded[:, :out_dim] if out_pad != out_dim else out_padded


def reference(x, weight, bias, gamma, beta):
    y = x @ weight.T + bias
    mean = jnp.mean(y, axis=0, keepdims=True)
    var = jnp.mean((y - mean) ** 2, axis=0, keepdims=True)
    z = (y - mean) / jnp.sqrt(var + BN_EPS) * gamma + beta
    return jnp.where(z >= 0.0, z, LEAKY_SLOPE * z)


if __name__ == "__main__":
    key = jax.random.PRNGKey(0)
    # Small but non-trivial: exercises K-tiling (192 -> 2x128), F-tiling (160 -> 2x128)
    # and zero-padding of both feature axes.
    N, IN_DIM, OUT_DIM = 64, 192, 160

    kx, kw, kb, kg, kbe = jax.random.split(key, 5)
    x = jax.random.normal(kx, (N, IN_DIM), dtype=jnp.float32)

    bound = 1.0 / jnp.sqrt(jnp.float32(IN_DIM))
    weight = jax.random.uniform(kw, (OUT_DIM, IN_DIM), jnp.float32, -bound, bound)
    bias = jax.random.uniform(kb, (OUT_DIM,), jnp.float32, -bound, bound)
    gamma = jax.random.uniform(kg, (OUT_DIM,), jnp.float32, 0.5, 1.5)
    beta = 0.1 * jax.random.normal(kbe, (OUT_DIM,), dtype=jnp.float32)

    out = nn_fcbnrl_mm(x, weight, bias, gamma, beta)
    out = jax.block_until_ready(out)

    ref = reference(x, weight, bias, gamma, beta)
    assert out.shape == (N, OUT_DIM)
    assert jnp.allclose(out, ref, atol=1e-4, rtol=1e-4), "mismatch vs reference"

    print("KERNEL_OK")
</pallas_src>

<mosaic_0001>
module attributes {stable_mosaic.version = 11 : i64} {
  func.func @fcbnrl_kernel(%arg0: i32, %arg1: i32, %arg2: memref<64x128xf32, #tpu.memory_space<vmem>>, %arg3: memref<128x128xf32, #tpu.memory_space<vmem>>, %arg4: memref<1x128xf32, #tpu.memory_space<vmem>>, %arg5: memref<1x128xf32, #tpu.memory_space<vmem>>, %arg6: memref<64x128xf32, #tpu.memory_space<vmem>>, %arg7: memref<64x128xf32, #tpu.memory_space<vmem>>) attributes {dimension_semantics = [#tpu.dimension_semantics<parallel>, #tpu.dimension_semantics<arbitrary>], iteration_bounds = array<i64: 2, 2>, scalar_prefetch = 0 : i64, scratch_operands = 1 : i64, tpu.core_type = #tpu.core_type<tc>, window_params = [{transform_indices = @transform_0, window_bounds = array<i64: 64, 128>}, {transform_indices = @transform_1, window_bounds = array<i64: 128, 128>}, {transform_indices = @transform_2, window_bounds = array<i64: 1, 128>}, {transform_indices = @transform_3, window_bounds = array<i64: 1, 128>}, {transform_indices = @transform_4, window_bounds = array<i64: 64, 128>}]} {
    %c0_i32 = arith.constant 0 : i32
    %0 = arith.cmpi eq, %arg1, %c0_i32 : i32
    %1 = arith.extui %0 : i1 to i32
    %c0_i32_0 = arith.constant 0 : i32
    %2 = arith.cmpi ne, %1, %c0_i32_0 : i32
    scf.if %2 {
      %cst_9 = arith.constant 0.000000e+00 : f32
      %12 = vector.broadcast %cst_9 : f32 to vector<64x128xf32>
      %c0_10 = arith.constant 0 : index
      %c0_11 = arith.constant 0 : index
      %13 = vector.load %arg7[%c0_10, %c0_11] : memref<64x128xf32, #tpu.memory_space<vmem>>, vector<64x128xf32>
      tpu.vector_store %arg7[%c0_10, %c0_11], %12 {strides = array<i32>} : memref<64x128xf32, #tpu.memory_space<vmem>>, vector<64x128xf32>,
    } else {
    }
    %c0 = arith.constant 0 : index
    %c0_1 = arith.constant 0 : index
    %3 = vector.load %arg7[%c0, %c0_1] : memref<64x128xf32, #tpu.memory_space<vmem>>, vector<64x128xf32>
    %c0_2 = arith.constant 0 : index
    %c0_3 = arith.constant 0 : index
    %4 = vector.load %arg2[%c0_2, %c0_3] : memref<64x128xf32, #tpu.memory_space<vmem>>, vector<64x128xf32>
    %c0_4 = arith.constant 0 : index
    %c0_5 = arith.constant 0 : index
    %5 = vector.load %arg3[%c0_4, %c0_5] : memref<128x128xf32, #tpu.memory_space<vmem>>, vector<128x128xf32>
    %cst = arith.constant dense<0.000000e+00> : vector<64x128xf32>
    %6 = tpu.matmul %4, %5, %cst {dimension_numbers = #tpu.dot_dimension_numbers<[1], [1], [0], [0], [0, 0, 1, 0], [], []>} : vector<64x128xf32>, vector<128x128xf32>, vector<64x128xf32> -> vector<64x128xf32>
    %7 = arith.addf %3, %6 : vector<64x128xf32>
    %c0_6 = arith.constant 0 : index
    %c0_7 = arith.constant 0 : index
    %8 = vector.load %arg7[%c0_6, %c0_7] : memref<64x128xf32, #tpu.memory_space<vmem>>, vector<64x128xf32>
    tpu.vector_store %arg7[%c0_6, %c0_7], %7 {strides = array<i32>} : memref<64x128xf32, #tpu.memory_space<vmem>>, vector<64x128xf32>,
    %c1_i32 = arith.constant 1 : i32
    %9 = arith.cmpi eq, %arg1, %c1_i32 : i32
    %10 = arith.extui %9 : i1 to i32
    %c0_i32_8 = arith.constant 0 : i32
    %11 = arith.cmpi ne, %10, %c0_i32_8 : i32
    scf.if %11 {
      %c0_9 = arith.constant 0 : index
      %c0_10 = arith.constant 0 : index
      %12 = vector.load %arg7[%c0_9, %c0_10] : memref<64x128xf32, #tpu.memory_space<vmem>>, vector<64x128xf32>
      %cst_11 = arith.constant dense<0.000000e+00> : vector<128xf32>
      %13 = vector.multi_reduction <add>, %12, %cst_11 [0] : vector<64x128xf32> to vector<128xf32>
      %14 = vector.shape_cast %13 : vector<128xf32> to vector<1x128xf32>
      %15 = arith.mulf %12, %12 : vector<64x128xf32>
      %cst_12 = arith.constant dense<0.000000e+00> : vector<128xf32>
      %16 = vector.multi_reduction <add>, %15, %cst_12 [0] : vector<64x128xf32> to vector<128xf32>
      %17 = vector.shape_cast %16 : vector<128xf32> to vector<1x128xf32>
      %cst_13 = arith.constant 1.562500e-02 : f32
      %18 = vector.broadcast %cst_13 : f32 to vector<1x128xf32>
      %19 = arith.mulf %14, %18 : vector<1x128xf32>
      %cst_14 = arith.constant 1.562500e-02 : f32
      %20 = vector.broadcast %cst_14 : f32 to vector<1x128xf32>
      %21 = arith.mulf %17, %20 : vector<1x128xf32>
      %22 = arith.mulf %19, %19 : vector<1x128xf32>
      %23 = arith.subf %21, %22 : vector<1x128xf32>
      %cst_15 = arith.constant 0.000000e+00 : f32
      %24 = vector.broadcast %cst_15 : f32 to vector<1x128xf32>
      %25 = arith.maximumf %23, %24 : vector<1x128xf32>
      %c0_16 = arith.constant 0 : index
      %c0_17 = arith.constant 0 : index
      %26 = vector.load %arg4[%c0_16, %c0_17] : memref<1x128xf32, #tpu.memory_space<vmem>>, vector<1x128xf32>
      %cst_18 = arith.constant 9.99999974E-6 : f32
      %27 = vector.broadcast %cst_18 : f32 to vector<1x128xf32>
      %28 = arith.addf %25, %27 : vector<1x128xf32>
      %29 = math.rsqrt %28 : vector<1x128xf32>
      %30 = arith.mulf %26, %29 : vector<1x128xf32>
      %c0_19 = arith.constant 0 : index
      %c0_20 = arith.constant 0 : index
      %31 = vector.load %arg5[%c0_19, %c0_20] : memref<1x128xf32, #tpu.memory_space<vmem>>, vector<1x128xf32>
      %32 = arith.mulf %19, %30 : vector<1x128xf32>
      %33 = arith.subf %31, %32 : vector<1x128xf32>
      %34 = vector.broadcast %30 : vector<1x128xf32> to vector<64x128xf32>
      %35 = arith.mulf %12, %34 : vector<64x128xf32>
      %36 = vector.broadcast %33 : vector<1x128xf32> to vector<64x128xf32>
      %37 = arith.addf %35, %36 : vector<64x128xf32>
      %cst_21 = arith.constant 0.000000e+00 : f32
      %38 = vector.broadcast %cst_21 : f32 to vector<64x128xf32>
      %39 = arith.cmpf oge, %37, %38 : vector<64x128xf32>
      %cst_22 = arith.constant 1.000000e-01 : f32
      %40 = vector.broadcast %cst_22 : f32 to vector<64x128xf32>
      %41 = arith.mulf %40, %37 : vector<64x128xf32>
      %42 = arith.select %39, %37, %41 : vector<64x128xi1>, vector<64x128xf32>
      %c0_23 = arith.constant 0 : index
      %c0_24 = arith.constant 0 : index
      %43 = vector.load %arg6[%c0_23, %c0_24] : memref<64x128xf32, #tpu.memory_space<vmem>>, vector<64x128xf32>
      tpu.vector_store %arg6[%c0_23, %c0_24], %42 {strides = array<i32>} : memref<64x128xf32, #tpu.memory_space<vmem>>, vector<64x128xf32>,
    } else {
    }
    return
  }
  func.func @transform_0(%arg0: i32, %arg1: i32) -> (i32, i32) {
    %c0_i32 = arith.constant 0 : i32
    %c0_i32_0 = arith.constant 0 : i32
    return %c0_i32, %arg1 : i32, i32
  }
  func.func @transform_1(%arg0: i32, %arg1: i32) -> (i32, i32) {
    %c0_i32 = arith.constant 0 : i32
    return %arg0, %arg1 : i32, i32
  }
  func.func @transform_2(%arg0: i32, %arg1: i32) -> (i32, i32) {
    %c0_i32 = arith.constant 0 : i32
    %c0_i32_0 = arith.constant 0 : i32
    return %c0_i32, %arg0 : i32, i32
  }
  func.func @transform_3(%arg0: i32, %arg1: i32) -> (i32, i32) {
    %c0_i32 = arith.constant 0 : i32
    %c0_i32_0 = arith.constant 0 : i32
    return %c0_i32, %arg0 : i32, i32
  }
  func.func @transform_4(%arg0: i32, %arg1: i32) -> (i32, i32) {
    %c0_i32 = arith.constant 0 : i32
    %c0_i32_0 = arith.constant 0 : i32
    return %c0_i32, %arg0 : i32, i32
  }
}

</mosaic_0001>

<llo_original>
// kernel: tpu_custom_call.1
$region0: #{tpu_custom_call.1}
  #allocation0 [shape = 'u32[]', space=smem, size = 0x4, offset = 0x4, fixed_abs, tag = 'smem constant byte address 0x4 - core index']
  #allocation1 [shape = 'u32[144,128]{1,0:T(1,128)}', space=vmem, size = 0x12000, scoped, tag = 'internal scratch']
  #allocation2 [shape = 'f32[64,128]{1,0:T(8,128)}', space=vmem, size = 0x8000, scoped, tag = 'scratch operand']
  %s0 = inlined_call_operand.hbm [shape: f32[64,256], index: 0, kind: input, shape index: {}]
  %s1 = inlined_call_operand.hbm [shape: f32[256,256], index: 1, kind: input, shape index: {}]
  %s2 = inlined_call_operand.vmem [shape: f32[1,256], index: 2, kind: input, shape index: {}]
  %s3 = inlined_call_operand.vmem [shape: f32[1,256], index: 3, kind: input, shape index: {}]
  %s4 = inlined_call_operand.hbm [shape: f32[64,256], index: 4, kind: output, shape index: {}]
  %s5 = sld [smem:[#allocation0]]
  $region65: #{tpu_custom_call.1} parent=0
    _
  %s7 = ssub.s32 1, %s5
  %s8 = scalar_select 0, %s7, %s5
  $region1: #{tpu_custom_call.1} parent=0
    #allocation3 [shape = 'u8[65536]{0}', space=vmem, size = 0x10000, scoped, tag = 'input window, operand 0']
    #allocation4 [shape = 's32[2]{0}', space=sflag, size = 0x8, scoped, tag = 'scoped memory for tpu_custom_call.1']
    #allocation5 [shape = 's32[2]{0}', space=sflag, size = 0x8, scoped, tag = 'scoped memory for tpu_custom_call.1']
    #allocation6 [shape = 'u8[131072]{0}', space=vmem, size = 0x20000, scoped, tag = 'input window, operand 1']
    #allocation7 [shape = 's32[2]{0}', space=sflag, size = 0x8, scoped, tag = 'scoped memory for tpu_custom_call.1']
    #allocation8 [shape = 'u8[65536]{0}', space=vmem, size = 0x10000, scoped, tag = 'output window, operand 0']
    %9 = vsyncpa [#allocation4], 0
    %s10 = scalar_lea.sflag [#allocation4], 1
    %11 = vsyncpa %s10, 0
    %12 = vsyncpa [#allocation7], 0
    %s13 = scalar_lea.sflag [#allocation7], 1
    %14 = vsyncpa %s13, 0
    %15 = vsyncpa [#allocation5], 0
    %s16 = scalar_lea.sflag [#allocation5], 1
    %17 = vsyncpa %s16, 0
    loop: start=0, step=1, limit=6
    $region2: #{tpu_custom_call.1} parent=1 // loop_pre_header
      _
    $region3: #{tpu_custom_call.1} parent=1 // loop_header
      %s19 = sphi 0, %s23
      %p20 = scmp.ge.s32.totalorder %s19, 6
      %s26 = sphi 0, %s38
      %s27 = sphi 0, %s34
      %s28 = sphi 0, %s26
      %s29 = sphi 0, %s27
      %s30 = sphi 0, %s28
      %s31 = sphi 0, %s29
      %s41 = sphi 0, %s43
      %s44 = sphi 0, %s41
      %s45 = sphi 0, %s44
      %s61 = sphi 0, %s45
      %s69 = sphi 0, %s71
      %s72 = sphi 0, %s69
      %s73 = sphi 0, %s72
      %s89 = sphi 0, %s73
      %s95 = sphi 0, %s97
      %s98 = sphi 0, %s95
      %s99 = sphi 0, %s98
      %s115 = sphi 0, %s99
      %s121 = sphi 0, %s123
      %s124 = sphi 0, %s121
      %s125 = sphi 0, %s124
      %s141 = sphi 0, %s125
      %s147 = sphi 0, %s149
      %s150 = sphi 0, %s147
      %s151 = sphi 0, %s150
      %s167 = sphi 0, %s151
    $region4: #{tpu_custom_call.1} parent=1 // loop_header_branch
      %22 = sbr.rel (%p20) target = $region8
    $region5: #{tpu_custom_call.1} parent=1 // loop_body
      %s24 = ssub.s32 %s19, 1
      %s25 = ssub.s32 %s19, 2
      %s32 = sadd.s32 1, %s27
      %p33 = scmp.ge.s32.totalorder %s32, 2
      %s34 = scalar_select %p33, 0, %s32
      %s35 = sadd.s32 1, %s26
      %s36 = scalar_select %p33, %s35, %s26
      %p37 = scmp.ge.s32.totalorder %s36, 2
      %s38 = scalar_select %p37, 0, %s36
      %s39 = ssub.s32 %s27, %s34
      %p40 = scmp.eq.s32.totalorder %s39, 0
      %s42 = sadd.s32 %s41, 1
      %s43 = scalar_select %p40, %s41, %s42
      %p46 = pneg %p40
      %p47 = scmp.eq.s32.totalorder %s19, 3
      %p48 = por %p46, %p47
      %p49 = scmp.ne.s32.totalorder %s41, %s44
      %p50 = scmp.eq.s32.totalorder %s19, 0
      %p51 = por %p49, %p50
      %p52 = scmp.ne.s32.totalorder %s41, %s44
      %p53 = scmp.eq.s32.totalorder %s24, 3
      %p54 = por %p52, %p53
      %p55 = scmp.ne.s32.totalorder %s44, %s45
      %p56 = scmp.eq.s32.totalorder %s24, 0
      %p57 = por %p55, %p56
      %p58 = scmp.ne.s32.totalorder %s44, %s45
      %p59 = scmp.eq.s32.totalorder %s25, 3
      %p60 = por %p58, %p59
      %p62 = scmp.ne.s32.totalorder %s45, %s61
      %p63 = scmp.eq.s32.totalorder %s25, 0
      %p64 = por %p62, %p63
      %s65 = ssub.s32 %s26, %s38
      %s66 = ssub.s32 %s27, %s34
      %s67 = sor.u32 %s65, %s66
      %p68 = scmp.eq.s32.totalorder %s67, 0
      %s70 = sadd.s32 %s69, 1
      %s71 = scalar_select %p68, %s69, %s70
      %p74 = pneg %p68
      %p75 = scmp.eq.s32.totalorder %s19, 3
      %p76 = por %p74, %p75
      %p77 = scmp.ne.s32.totalorder %s69, %s72
      %p78 = scmp.eq.s32.totalorder %s19, 0
      %p79 = por %p77, %p78
      %p80 = scmp.ne.s32.totalorder %s69, %s72
      %p81 = scmp.eq.s32.totalorder %s24, 3
      %p82 = por %p80, %p81
      %p83 = scmp.ne.s32.totalorder %s72, %s73
      %p84 = scmp.eq.s32.totalorder %s24, 0
      %p85 = por %p83, %p84
      %p86 = scmp.ne.s32.totalorder %s72, %s73
      %p87 = scmp.eq.s32.totalorder %s25, 3
      %p88 = por %p86, %p87
      %p90 = scmp.ne.s32.totalorder %s73, %s89
      %p91 = scmp.eq.s32.totalorder %s25, 0
      %p92 = por %p90, %p91
      %s93 = ssub.s32 %s26, %s38
      %p94 = scmp.eq.s32.totalorder %s93, 0
      %s96 = sadd.s32 %s95, 1
      %s97 = scalar_select %p94, %s95, %s96
      %p100 = pneg %p94
      %p101 = scmp.eq.s32.totalorder %s19, 3
      %p102 = por %p100, %p101
      %p103 = scmp.ne.s32.totalorder %s95, %s98
      %p104 = scmp.eq.s32.totalorder %s19, 0
      %p105 = por %p103, %p104
      %p106 = scmp.ne.s32.totalorder %s95, %s98
      %p107 = scmp.eq.s32.totalorder %s24, 3
      %p108 = por %p106, %p107
      %p109 = scmp.ne.s32.totalorder %s98, %s99
      %p110 = scmp.eq.s32.totalorder %s24, 0
      %p111 = por %p109, %p110
      %p112 = scmp.ne.s32.totalorder %s98, %s99
      %p113 = scmp.eq.s32.totalorder %s25, 3
      %p114 = por %p112, %p113
      %p116 = scmp.ne.s32.totalorder %s99, %s115
      %p117 = scmp.eq.s32.totalorder %s25, 0
      %p118 = por %p116, %p117
      %s119 = ssub.s32 %s26, %s38
      %p120 = scmp.eq.s32.totalorder %s119, 0
      %s122 = sadd.s32 %s121, 1
      %s123 = scalar_select %p120, %s121, %s122
      %p126 = pneg %p120
      %p127 = scmp.eq.s32.totalorder %s19, 3
      %p128 = por %p126, %p127
      %p129 = scmp.ne.s32.totalorder %s121, %s124
      %p130 = scmp.eq.s32.totalorder %s19, 0
      %p131 = por %p129, %p130
      %p132 = scmp.ne.s32.totalorder %s121, %s124
      %p133 = scmp.eq.s32.totalorder %s24, 3
      %p134 = por %p132, %p133
      %p135 = scmp.ne.s32.totalorder %s124, %s125
      %p136 = scmp.eq.s32.totalorder %s24, 0
      %p137 = por %p135, %p136
      %p138 = scmp.ne.s32.totalorder %s124, %s125
      %p139 = scmp.eq.s32.totalorder %s25, 3
      %p140 = por %p138, %p139
      %p142 = scmp.ne.s32.totalorder %s125, %s141
      %p143 = scmp.eq.s32.totalorder %s25, 0
      %p144 = por %p142, %p143
      %s145 = ssub.s32 %s26, %s38
      %p146 = scmp.eq.s32.totalorder %s145, 0
      %s148 = sadd.s32 %s147, 1
      %s149 = scalar_select %p146, %s147, %s148
      %p152 = pneg %p146
      %p153 = scmp.eq.s32.totalorder %s19, 3
      %p154 = por %p152, %p153
      %p155 = scmp.ne.s32.totalorder %s147, %s150
      %p156 = scmp.eq.s32.totalorder %s19, 0
      %p157 = por %p155, %p156
      %p158 = scmp.ne.s32.totalorder %s147, %s150
      %p159 = scmp.eq.s32.totalorder %s24, 3
      %p160 = por %p158, %p159
      %p161 = scmp.ne.s32.totalorder %s150, %s151
      %p162 = scmp.eq.s32.totalorder %s24, 0
      %p163 = por %p161, %p162
      %p164 = scmp.ne.s32.totalorder %s150, %s151
      %p165 = scmp.eq.s32.totalorder %s25, 3
      %p166 = por %p164, %p165
      %p168 = scmp.ne.s32.totalorder %s151, %s167
      %p169 = scmp.eq.s32.totalorder %s25, 0
      %p170 = por %p168, %p169
      %p171 = scmp.le.s32.totalorder 1, %s19
      %p172 = scmp.lt.s32.totalorder %s19, 5
      %p173 = pnand %p171, %p172
      %p174 = pneg %p173
      // Predicated region
      $region9: #{tpu_custom_call.1} parent=5 // pred_check
        _
      $region10: #{tpu_custom_call.1} parent=5 // pred_check_branch
        %176 = sbr.rel (%p173) target = $region12
      $region11: #{tpu_custom_call.1} parent=5 // pred_region
        %s177 = ssub.s32 %s19, 1
      $region12: #{tpu_custom_call.1} parent=5 // pred_fallthru
        _
      %p178 = scmp.lt.s32.totalorder %s19, 4
      // Predicated region
      $region13: #{tpu_custom_call.1} parent=5 // pred_check
        %p179 = pneg %p178
      $region14: #{tpu_custom_call.1} parent=5 // pred_check_branch
        %181 = sbr.rel (%p179) target = $region16
      $region15: #{tpu_custom_call.1} parent=5 // pred_region
        // Predicated region
        $region17: #{tpu_custom_call.1} parent=15 // pred_check
          %p182 = pneg %p51
        $region18: #{tpu_custom_call.1} parent=15 // pred_check_branch
          %184 = sbr.rel (%p182) target = $region20
        $region19: #{tpu_custom_call.1} parent=15 // pred_region
          %s185 = sand.u32 %s41, 1
          %s186 = scalar_lea.sflag [#allocation4], %s185
          %s187 = sand.u32 %s41, 1
          %s188 = smul.addr %s187, 64
          %s189 = scalar_lea.vmem [#allocation3], %s188
          %s191 = ssub.s32 1024, 1024
          %192 = vsyncadd %s186, %s191
          %s193 = smul.addr %s27, 128
          %s194 = scalar_lea.hbm %s0, %s193
          %s195 = sshll.u32 %s189, 4
          %s196 = int_to_ptr.vmem [resolvable:$true] %s195
          %201 = dma.hbm_to_vmem [thread:$0]  %s194, 1024, %s196, %s186, 256, 128, 8
        $region20: #{tpu_custom_call.1} parent=15 // pred_fallthru
          _
        // Predicated region
        $region21: #{tpu_custom_call.1} parent=15 // pred_check
          %p202 = pneg %p79
        $region22: #{tpu_custom_call.1} parent=15 // pred_check_branch
          %204 = sbr.rel (%p202) target = $region24
        $region23: #{tpu_custom_call.1} parent=15 // pred_region
          %s205 = sand.u32 %s69, 1
          %s206 = scalar_lea.sflag [#allocation7], %s205
          %s207 = sand.u32 %s69, 1
          %s208 = smul.addr %s207, 128
          %s209 = scalar_lea.vmem [#allocation6], %s208
          %s210 = smul.u32 16, %s26
          %s212 = ssub.s32 2048, 2048
          %213 = vsyncadd %s206, %s212
          %s214 = smul.addr %s210, 2
          %s215 = sadd.s32 %s27, %s214
          %s216 = smul.addr %s215, 128
          %s217 = scalar_lea.hbm %s1, %s216
          %s218 = sshll.u32 %s209, 4
          %s219 = int_to_ptr.vmem [resolvable:$true] %s218
          %224 = dma.hbm_to_vmem [thread:$0]  %s217, 2048, %s219, %s206, 256, 128, 8
        $region24: #{tpu_custom_call.1} parent=15 // pred_fallthru
          _
        // Predicated region
        $region25: #{tpu_custom_call.1} parent=15 // pred_check
          %p225 = pneg %p105
        $region26: #{tpu_custom_call.1} parent=15 // pred_check_branch
          %227 = sbr.rel (%p225) target = $region28
        $region27: #{tpu_custom_call.1} parent=15 // pred_region
          %p228 = scmp.lt.s32.totalorder %s26, 1
          %s229 = scalar_select %p228, %s26, 1
          %s230 = scalar_lea.vmem %s2, %s229
        $region28: #{tpu_custom_call.1} parent=15 // pred_fallthru
          _
        // Predicated region
        $region29: #{tpu_custom_call.1} parent=15 // pred_check
          %p231 = pneg %p131
        $region30: #{tpu_custom_call.1} parent=15 // pred_check_branch
          %233 = sbr.rel (%p231) target = $region32
        $region31: #{tpu_custom_call.1} parent=15 // pred_region
          %p234 = scmp.lt.s32.totalorder %s26, 1
          %s235 = scalar_select %p234, %s26, 1
          %s236 = scalar_lea.vmem %s3, %s235
        $region32: #{tpu_custom_call.1} parent=15 // pred_fallthru
          _
      $region16: #{tpu_custom_call.1} parent=5 // pred_fallthru
        _
      %p237 = scmp.le.s32.totalorder 1, %s19
      %p238 = scmp.lt.s32.totalorder %s19, 5
      %p239 = pnand %p237, %p238
      %p240 = pneg %p239
      // Predicated region
      $region33: #{tpu_custom_call.1} parent=5 // pred_check
        _
      $region34: #{tpu_custom_call.1} parent=5 // pred_check_branch
        %242 = sbr.rel (%p239) target = $region36
      $region35: #{tpu_custom_call.1} parent=5 // pred_region
        %s243 = ssub.s32 %s19, 1
        %s244 = sand.u32 %s44, 1
        %s245 = scalar_lea.sflag [#allocation4], %s244
        %s246 = sand.u32 %s44, 1
        %s247 = smul.addr %s246, 64
        %s248 = scalar_lea.vmem [#allocation3], %s247
        // Predicated region
        $region37: #{tpu_custom_call.1} parent=35 // pred_check
          %p249 = pneg %p57
        $region38: #{tpu_custom_call.1} parent=35 // pred_check_branch
          %251 = sbr.rel (%p249) target = $region40
        $region39: #{tpu_custom_call.1} parent=35 // pred_region
          %252 = dma.done %s245, 1024
        $region40: #{tpu_custom_call.1} parent=35 // pred_fallthru
          _
        %s253 = sand.u32 %s72, 1
        %s254 = scalar_lea.sflag [#allocation7], %s253
        %s255 = sand.u32 %s72, 1
        %s256 = smul.addr %s255, 128
        %s257 = scalar_lea.vmem [#allocation6], %s256
        // Predicated region
        $region41: #{tpu_custom_call.1} parent=35 // pred_check
          %p258 = pneg %p85
        $region42: #{tpu_custom_call.1} parent=35 // pred_check_branch
          %260 = sbr.rel (%p258) target = $region44
        $region43: #{tpu_custom_call.1} parent=35 // pred_region
          %261 = dma.done %s254, 2048
        $region44: #{tpu_custom_call.1} parent=35 // pred_fallthru
          _
        %s262 = sand.u32 %s44, 1
        %s263 = scalar_lea.sflag [#allocation4], %s262
        %s264 = sand.u32 %s44, 1
        %s265 = smul.addr %s264, 64
        %s266 = scalar_lea.vmem [#allocation3], %s265
        %p267 = pneg %p57
        %p268 = pneg %p54
        %s269 = sand.u32 %s72, 1
        %s270 = scalar_lea.sflag [#allocation7], %s269
        %s271 = sand.u32 %s72, 1
        %s272 = smul.addr %s271, 128
        %s273 = scalar_lea.vmem [#allocation6], %s272
        %p274 = pneg %p85
        %p275 = pneg %p82
        %p276 = scmp.lt.s32.totalorder %s28, 1
        %s277 = scalar_select %p276, %s28, 1
        %s278 = scalar_lea.vmem %s2, %s277
        %p279 = pneg %p111
        %p280 = pneg %p108
        %p281 = scmp.lt.s32.totalorder %s28, 1
        %s282 = scalar_select %p281, %s28, 1
        %s283 = scalar_lea.vmem %s3, %s282
        %p284 = pneg %p137
        %p285 = pneg %p134
        %p286 = pneg %p163
        %p287 = pneg %p160
        %s288 = sand.u32 %s150, 1
        %s289 = scalar_lea.sflag [#allocation5], %s288
        %s290 = sand.u32 %s150, 1
        %s291 = smul.addr %s290, 64
        %s292 = scalar_lea.vmem [#allocation8], %s291
        %s293 = smul.u32 16, %s28
        %p294 = scmp.lt.s32.totalorder %s28, 1
        %s295 = scalar_select %p294, %s28, 1
        %s296 = scalar_lea.vmem %s2, %s295
        %p297 = scmp.lt.s32.totalorder %s28, 1
        %s298 = scalar_select %p297, %s28, 1
        %s299 = scalar_lea.vmem %s3, %s298
        %p300 = scmp.eq.s32.totalorder %s29, 0
        // Predicated region
        $region45: #{tpu_custom_call.1} parent=35 // pred_check
          %p301 = pneg %p300
        $region46: #{tpu_custom_call.1} parent=35 // pred_check_branch
          %303 = sbr.rel (%p301) target = $region48
        $region47: #{tpu_custom_call.1} parent=35 // pred_region
          %304 = vst [vmem:[#allocation2] sm:$0xff] 0.0
          %305 = vst [vmem:[#allocation2 + $0x8] sm:$0xff] 0.0
          %306 = vst [vmem:[#allocation2 + $0x10] sm:$0xff] 0.0
          %307 = vst [vmem:[#allocation2 + $0x18] sm:$0xff] 0.0
          %308 = vst [vmem:[#allocation2 + $0x20] sm:$0xff] 0.0
          %309 = vst [vmem:[#allocation2 + $0x28] sm:$0xff] 0.0
          %310 = vst [vmem:[#allocation2 + $0x30] sm:$0xff] 0.0
          %311 = vst [vmem:[#allocation2 + $0x38] sm:$0xff] 0.0
        $region48: #{tpu_custom_call.1} parent=35 // pred_fallthru
          _
        %v312 = vld [vmem:[#allocation2] sm:$0xff]
        %v313 = vld [vmem:[#allocation2 + $0x8] sm:$0xff]
        %v314 = vld [vmem:[#allocation2 + $0x10] sm:$0xff]
        %v315 = vld [vmem:[#allocation2 + $0x18] sm:$0xff]
        %v316 = vld [vmem:[#allocation2 + $0x20] sm:$0xff]
        %v317 = vld [vmem:[#allocation2 + $0x28] sm:$0xff]
        %v318 = vld [vmem:[#allocation2 + $0x30] sm:$0xff]
        %v319 = vld [vmem:[#allocation2 + $0x38] sm:$0xff]
        %v320 = vld [vmem:[%s248] sm:$0xff]
        %v321 = vld [vmem:[%s248 + $0x8] sm:$0xff]
        %v322 = vld [vmem:[%s248 + $0x10] sm:$0xff]
        %v323 = vld [vmem:[%s248 + $0x18] sm:$0xff]
        %v324 = vld [vmem:[%s248 + $0x20] sm:$0xff]
        %v325 = vld [vmem:[%s248 + $0x28] sm:$0xff]
        %v326 = vld [vmem:[%s248 + $0x30] sm:$0xff]
        %v327 = vld [vmem:[%s248 + $0x38] sm:$0xff]
        %v328 = vld [vmem:[%s257] sm:$0xff]
        %v329 = vld [vmem:[%s257 + $0x8] sm:$0xff]
        %v330 = vld [vmem:[%s257 + $0x10] sm:$0xff]
        %v331 = vld [vmem:[%s257 + $0x18] sm:$0xff]
        %v332 = vld [vmem:[%s257 + $0x20] sm:$0xff]
        %v333 = vld [vmem:[%s257 + $0x28] sm:$0xff]
        %v334 = vld [vmem:[%s257 + $0x30] sm:$0xff]
        %v335 = vld [vmem:[%s257 + $0x38] sm:$0xff]
        %v336 = vld [vmem:[%s257 + $0x40] sm:$0xff]
        %v337 = vld [vmem:[%s257 + $0x48] sm:$0xff]
        %v338 = vld [vmem:[%s257 + $0x50] sm:$0xff]
        %v339 = vld [vmem:[%s257 + $0x58] sm:$0xff]
        %v340 = vld [vmem:[%s257 + $0x60] sm:$0xff]
        %v341 = vld [vmem:[%s257 + $0x68] sm:$0xff]
        %v342 = vld [vmem:[%s257 + $0x70] sm:$0xff]
        %v343 = vld [vmem:[%s257 + $0x78] sm:$0xff]
        %344 = vmatprep.subr.mxu0 0.0
        %345 = vmatpush1.xpose.msra.mxu0 %v343
        %346 = vmatprep.subr.mxu0 0.0
        %347 = vmatpush1.xpose.msra.mxu0 %v342
        %348 = vmatprep.subr.mxu0 0.0
        %349 = vmatpush1.xpose.msra.mxu0 %v341
        %350 = vmatprep.subr.mxu0 0.0
        %351 = vmatpush1.xpose.msra.mxu0 %v340
        %352 = vmatprep.subr.mxu0 0.0
        %353 = vmatpush1.xpose.msra.mxu0 %v339
        %354 = vmatprep.subr.mxu0 0.0
        %355 = vmatpush1.xpose.msra.mxu0 %v338
        %356 = vmatprep.subr.mxu0 0.0
        %357 = vmatpush1.xpose.msra.mxu0 %v337
        %358 = vmatprep.subr.mxu0 0.0
        %359 = vmatpush1.xpose.msra.mxu0 %v336
        %360 = vmatprep.subr.mxu0 0.0
        %361 = vmatpush1.xpose.msra.mxu0 %v335
        %362 = vmatprep.subr.mxu0 0.0
        %363 = vmatpush1.xpose.msra.mxu0 %v334
        %364 = vmatprep.subr.mxu0 0.0
        %365 = vmatpush1.xpose.msra.mxu0 %v333
        %366 = vmatprep.subr.mxu0 0.0
        %367 = vmatpush1.xpose.msra.mxu0 %v332
        %368 = vmatprep.subr.mxu0 0.0
        %369 = vmatpush1.xpose.msra.mxu0 %v331
        %370 = vmatprep.subr.mxu0 0.0
        %371 = vmatpush1.xpose.msra.mxu0 %v330
        %372 = vmatprep.subr.mxu0 0.0
        %373 = vmatpush1.xpose.msra.mxu0 %v329
        %374 = vmatprep.subr.mxu0 0.0
        %375 = vmatpush1.xpose.msra.mxu0 %v328
        %376 = vmatprep.subr.mxu0 0.0
        %377 = vmatpush2.xpose.msra.mxu0 0.0
        %378 = vmatprep.subr.mxu0 0.0
        %379 = vmatpush2.xpose.msra.mxu0 0.0
        %380 = vmatprep.subr.mxu0 0.0
        %381 = vmatpush2.xpose.msra.mxu0 0.0
        %382 = vmatprep.subr.mxu0 0.0
        %383 = vmatpush2.xpose.msra.mxu0 0.0
        %384 = vmatprep.subr.mxu0 0.0
        %385 = vmatpush2.xpose.msra.mxu0 0.0
        %386 = vmatprep.subr.mxu0 0.0
        %387 = vmatpush2.xpose.msra.mxu0 0.0
        %388 = vmatprep.subr.mxu0 0.0
        %389 = vmatpush2.xpose.msra.mxu0 0.0
        %390 = vmatprep.subr.mxu0 0.0
        %391 = vmatpush2.xpose.msra.mxu0 0.0
        %392 = vmatprep.subr.mxu0 0.0
        %393 = vmatpush2.xpose.msra.mxu0 0.0
        %394 = vmatprep.subr.mxu0 0.0
        %395 = vmatpush2.xpose.msra.mxu0 0.0
        %396 = vmatprep.subr.mxu0 0.0
        %397 = vmatpush2.xpose.msra.mxu0 0.0
        %398 = vmatprep.subr.mxu0 0.0
        %399 = vmatpush2.xpose.msra.mxu0 0.0
        %400 = vmatprep.subr.mxu0 0.0
        %401 = vmatpush2.xpose.msra.mxu0 0.0
        %402 = vmatprep.subr.mxu0 0.0
        %403 = vmatpush2.xpose.msra.mxu0 0.0
        %404 = vmatprep.subr.mxu0 0.0
        %405 = vmatpush2.xpose.msra.mxu0 0.0
        %406 = vmatprep.subr.mxu0 0.0
        %407 = vmatpush2.xpose.msra.mxu0 0.0
        %408 = vmatprep.mubr.f32.mxu0 0.0
        %409 = vmatmul.mubr.f32.gmra.mxu0 %v320
        %v410 = vpop.f32.mrf.mxu0
        %v411 = vadd.f32 0.0, %v410
        %v412 = vpop.f32.mrf.mxu0
        %413 = vmatprep.mubr.f32.mxu0 0.0
        %414 = vmatmul.mubr.f32.gmra.mxu0 %v321
        %v415 = vpop.f32.mrf.mxu0
        %v416 = vadd.f32 0.0, %v415
        %v417 = vpop.f32.mrf.mxu0
        %418 = vmatprep.mubr.f32.mxu0 0.0
        %419 = vmatmul.mubr.f32.gmra.mxu0 %v322
        %v420 = vpop.f32.mrf.mxu0
        %v421 = vadd.f32 0.0, %v420
        %v422 = vpop.f32.mrf.mxu0
        %423 = vmatprep.mubr.f32.mxu0 0.0
        %424 = vmatmul.mubr.f32.gmra.mxu0 %v323
        %v425 = vpop.f32.mrf.mxu0
        %v426 = vadd.f32 0.0, %v425
        %v427 = vpop.f32.mrf.mxu0
        %428 = vmatprep.mubr.f32.mxu0 0.0
        %429 = vmatmul.mubr.f32.gmra.mxu0 %v324
        %v430 = vpop.f32.mrf.mxu0
        %v431 = vadd.f32 0.0, %v430
        %v432 = vpop.f32.mrf.mxu0
        %433 = vmatprep.mubr.f32.mxu0 0.0
        %434 = vmatmul.mubr.f32.gmra.mxu0 %v325
        %v435 = vpop.f32.mrf.mxu0
        %v436 = vadd.f32 0.0, %v435
        %v437 = vpop.f32.mrf.mxu0
        %438 = vmatprep.mubr.f32.mxu0 0.0
        %439 = vmatmul.mubr.f32.gmra.mxu0 %v326
        %v440 = vpop.f32.mrf.mxu0
        %v441 = vadd.f32 0.0, %v440
        %v442 = vpop.f32.mrf.mxu0
        %443 = vmatprep.mubr.f32.mxu0 0.0
        %444 = vmatmul.mubr.f32.gmra.mxu0 %v327
        %v445 = vpop.f32.mrf.mxu0
        %v446 = vadd.f32 0.0, %v445
        %v447 = vpop.f32.mrf.mxu0
        %448 = vdwg.mxu0
        %v449 = vadd.f32 %v312, %v411
        %v450 = vadd.f32 %v313, %v416
        %v451 = vadd.f32 %v314, %v421
        %v452 = vadd.f32 %v315, %v426
        %v453 = vadd.f32 %v316, %v431
        %v454 = vadd.f32 %v317, %v436
        %v455 = vadd.f32 %v318, %v441
        %v456 = vadd.f32 %v319, %v446
        %457 = vst [vmem:[#allocation2] sm:$0xff] %v449
        %458 = vst [vmem:[#allocation2 + $0x8] sm:$0xff] %v450
        %459 = vst [vmem:[#allocation2 + $0x10] sm:$0xff] %v451
        %460 = vst [vmem:[#allocation2 + $0x18] sm:$0xff] %v452
        %461 = vst [vmem:[#allocation2 + $0x20] sm:$0xff] %v453
        %462 = vst [vmem:[#allocation2 + $0x28] sm:$0xff] %v454
        %463 = vst [vmem:[#allocation2 + $0x30] sm:$0xff] %v455
        %464 = vst [vmem:[#allocation2 + $0x38] sm:$0xff] %v456
        %p465 = scmp.eq.s32.totalorder %s29, 1
        // Predicated region
        $region49: #{tpu_custom_call.1} parent=35 // pred_check
          %p466 = pneg %p465
        $region50: #{tpu_custom_call.1} parent=35 // pred_check_branch
          %468 = sbr.rel (%p466) target = $region52
        $region51: #{tpu_custom_call.1} parent=35 // pred_region
          %v469 = vld [vmem:[#allocation2] sm:$0xff]
          %v470 = vld [vmem:[#allocation2 + $0x8] sm:$0xff]
          %v471 = vld [vmem:[#allocation2 + $0x10] sm:$0xff]
          %v472 = vld [vmem:[#allocation2 + $0x18] sm:$0xff]
          %v473 = vld [vmem:[#allocation2 + $0x20] sm:$0xff]
          %v474 = vld [vmem:[#allocation2 + $0x28] sm:$0xff]
          %v475 = vld [vmem:[#allocation2 + $0x30] sm:$0xff]
          %v476 = vld [vmem:[#allocation2 + $0x38] sm:$0xff]
          %v477 = vadd.f32 %v469, %v470
          %v478 = vadd.f32 %v477, %v471
          %v479 = vadd.f32 %v478, %v472
          %v480 = vadd.f32 %v479, %v473
          %v481 = vadd.f32 %v480, %v474
          %v482 = vadd.f32 %v481, %v475
          %v483 = vadd.f32 %v482, %v476
          %v484 = vrot.slane %v483, 4
          %v485 = vadd.f32 %v483, %v484
          %v486 = vrot.slane %v485, 2
          %v487 = vadd.f32 %v485, %v486
          %v488 = vrot.slane %v487, 1
          %v489 = vadd.f32 %v487, %v488
          %v490 = vmul.f32 %v469, %v469
          %v491 = vmul.f32 %v470, %v470
          %v492 = vmul.f32 %v471, %v471
          %v493 = vmul.f32 %v472, %v472
          %v494 = vmul.f32 %v473, %v473
          %v495 = vmul.f32 %v474, %v474
          %v496 = vmul.f32 %v475, %v475
          %v497 = vmul.f32 %v476, %v476
          %v498 = vadd.f32 %v490, %v491
          %v499 = vadd.f32 %v498, %v492
          %v500 = vadd.f32 %v499, %v493
          %v501 = vadd.f32 %v500, %v494
          %v502 = vadd.f32 %v501, %v495
          %v503 = vadd.f32 %v502, %v496
          %v504 = vadd.f32 %v503, %v497
          %v505 = vrot.slane %v504, 4
          %v506 = vadd.f32 %v504, %v505
          %v507 = vrot.slane %v506, 2
          %v508 = vadd.f32 %v506, %v507
          %v509 = vrot.slane %v508, 1
          %v510 = vadd.f32 %v508, %v509
          %v511 = vmul.f32 %v489, 0.015625
          %v512 = vmul.f32 %v510, 0.015625
          %v513 = vmul.f32 %v511, %v511
          %v514 = vsub.f32 %v512, %v513
          %v515 = vmax.f32 %v514, 0.0
          %v516 = vld [vmem:[%s296] sm:$0x1]
          %v517 = vadd.f32 %v515, 1e-05
          %v518 = vrsqrt.pop %v517
          %v519 = vmul.f32 %v516, %v518
          %v520 = vld [vmem:[%s299] sm:$0x1]
          %v521 = vmul.f32 %v511, %v519
          %v522 = vsub.f32 %v520, %v521
          %v524 = vlaneseq
          %v525 = vshrl.u32 %v524, 7
          %v526 = vsub.s32 0, %v525
          %v527 = vrot.slane %v519, %v526
          %v529 = vmul.f32 %v469, %v527
          %v530 = vmul.f32 %v470, %v527
          %v531 = vmul.f32 %v471, %v527
          %v532 = vmul.f32 %v472, %v527
          %v533 = vmul.f32 %v473, %v527
          %v534 = vmul.f32 %v474, %v527
          %v535 = vmul.f32 %v475, %v527
          %v536 = vmul.f32 %v476, %v527
          %v538 = vlaneseq
          %v539 = vshrl.u32 %v538, 7
          %v540 = vsub.s32 0, %v539
          %v541 = vrot.slane %v522, %v540
          %v543 = vadd.f32 %v529, %v541
          %v544 = vadd.f32 %v530, %v541
          %v545 = vadd.f32 %v531, %v541
          %v546 = vadd.f32 %v532, %v541
          %v547 = vadd.f32 %v533, %v541
          %v548 = vadd.f32 %v534, %v541
          %v549 = vadd.f32 %v535, %v541
          %v550 = vadd.f32 %v536, %v541
          %vm551 = vcmp.ge.f32.partialorder %v543, 0.0
          %vm552 = vcmp.ge.f32.partialorder %v544, 0.0
          %vm553 = vcmp.ge.f32.partialorder %v545, 0.0
          %vm554 = vcmp.ge.f32.partialorder %v546, 0.0
          %vm555 = vcmp.ge.f32.partialorder %v547, 0.0
          %vm556 = vcmp.ge.f32.partialorder %v548, 0.0
          %vm557 = vcmp.ge.f32.partialorder %v549, 0.0
          %vm558 = vcmp.ge.f32.partialorder %v550, 0.0
          %v559 = vmul.f32 %v543, 0.1
          %v560 = vmul.f32 %v544, 0.1
          %v561 = vmul.f32 %v545, 0.1
          %v562 = vmul.f32 %v546, 0.1
          %v563 = vmul.f32 %v547, 0.1
          %v564 = vmul.f32 %v548, 0.1
          %v565 = vmul.f32 %v549, 0.1
          %v566 = vmul.f32 %v550, 0.1
          %v567 = vsel %vm551, %v543, %v559
          %v568 = vsel %vm552, %v544, %v560
          %v569 = vsel %vm553, %v545, %v561
          %v570 = vsel %vm554, %v546, %v562
          %v571 = vsel %vm555, %v547, %v563
          %v572 = vsel %vm556, %v548, %v564
          %v573 = vsel %vm557, %v549, %v565
          %v574 = vsel %vm558, %v550, %v566
          %575 = vst [vmem:[%s292] sm:$0xff] %v567
          %576 = vst [vmem:[%s292 + $0x8] sm:$0xff] %v568
          %577 = vst [vmem:[%s292 + $0x10] sm:$0xff] %v569
          %578 = vst [vmem:[%s292 + $0x18] sm:$0xff] %v570
          %579 = vst [vmem:[%s292 + $0x20] sm:$0xff] %v571
          %580 = vst [vmem:[%s292 + $0x28] sm:$0xff] %v572
          %581 = vst [vmem:[%s292 + $0x30] sm:$0xff] %v573
          %582 = vst [vmem:[%s292 + $0x38] sm:$0xff] %v574
        $region52: #{tpu_custom_call.1} parent=35 // pred_fallthru
          _
        %s583 = sand.u32 %s150, 1
        %s584 = scalar_lea.sflag [#allocation5], %s583
        %s585 = sand.u32 %s150, 1
        %s586 = smul.addr %s585, 64
        %s587 = scalar_lea.vmem [#allocation8], %s586
        // Predicated region
        $region53: #{tpu_custom_call.1} parent=35 // pred_check
          %p588 = pneg %p160
        $region54: #{tpu_custom_call.1} parent=35 // pred_check_branch
          %590 = sbr.rel (%p588) target = $region56
        $region55: #{tpu_custom_call.1} parent=35 // pred_region
          %s592 = ssub.s32 1024, 1024
          %593 = vsyncadd %s584, %s592
          %s594 = smul.addr %s28, 128
          %s595 = scalar_lea.hbm %s4, %s594
          %s596 = sshll.u32 %s587, 4
          %s597 = int_to_ptr.vmem [resolvable:$true] %s596
          %602 = dma.vmem_to_hbm [thread:$0]  %s597, 1024, %s595, %s584, 128, 256, 8
        $region56: #{tpu_custom_call.1} parent=35 // pred_fallthru
          _
      $region36: #{tpu_custom_call.1} parent=5 // pred_fallthru
        _
      %p603 = scmp.le.s32.totalorder 2, %s19
      // Predicated region
      $region57: #{tpu_custom_call.1} parent=5 // pred_check
        %p604 = pneg %p603
      $region58: #{tpu_custom_call.1} parent=5 // pred_check_branch
        %606 = sbr.rel (%p604) target = $region60
      $region59: #{tpu_custom_call.1} parent=5 // pred_region
        %s607 = ssub.s32 %s19, 2
        // Predicated region
        $region61: #{tpu_custom_call.1} parent=59 // pred_check
          %p608 = pneg %p166
        $region62: #{tpu_custom_call.1} parent=59 // pred_check_branch
          %610 = sbr.rel (%p608) target = $region64
        $region63: #{tpu_custom_call.1} parent=59 // pred_region
          %s611 = sand.u32 %s151, 1
          %s612 = scalar_lea.sflag [#allocation5], %s611
          %s613 = sand.u32 %s151, 1
          %s614 = smul.addr %s613, 64
          %s615 = scalar_lea.vmem [#allocation8], %s614
          %616 = dma.done %s612, 1024
        $region64: #{tpu_custom_call.1} parent=59 // pred_fallthru
          _
      $region60: #{tpu_custom_call.1} parent=5 // pred_fallthru
        _
    $region6: #{tpu_custom_call.1} parent=1 // loop_footer
      %s23 = sadd.s32 1, %s19
    $region7: #{tpu_custom_call.1} parent=1 // loop_footer_branch
      %18 = sbr.rel target = $region3
    $region8: #{tpu_custom_call.1} parent=1 // loop_exit
      _
    %617 = vsyncpa [#allocation4], 1
    %s618 = scalar_lea.sflag [#allocation4], 1
    %619 = vsyncpa %s618, 1
    %620 = vsyncpa [#allocation7], 1
    %s621 = scalar_lea.sflag [#allocation7], 1
    %622 = vsyncpa %s621, 1
    %623 = vsyncpa [#allocation5], 1
    %s624 = scalar_lea.sflag [#allocation5], 1
    %625 = vsyncpa %s624, 1

</llo_original>
